<compile_context>
chip_gen: v7x
topology: tpu7x:2x2x1
jax: 0.10.0
libtpu: 0.0.40
codegen_flags: <defaults>
</compile_context>

<pallas_src>
import jax
import jax.numpy as jnp
from jax.experimental import pallas as pl
from jax.experimental.pallas import tpu as pltpu

EPS = 1e-5


def ghostbn_affine_kernel(x_ref, w_ref, b_ref, o_ref):
    # x_ref / o_ref: (Nh, CT, HW) block (full Nh and HW extents, CT = channel tile)
    # w_ref / b_ref: (R, 1) resident per-virtual-channel affine params (R = 2C)
    nh, ct, hw = x_ref.shape
    inv_cnt = 1.0 / float(nh * hw)

    x = x_ref[...]

    # one fused statistics sweep: per-channel sum and sum-of-squares
    xs = jnp.sum(x, axis=0)                        # (CT, HW)
    xq = jnp.sum(x * x, axis=0)                    # (CT, HW)
    s = jnp.sum(xs, axis=-1, keepdims=True)        # (CT, 1)
    sq = jnp.sum(xq, axis=-1, keepdims=True)       # (CT, 1)

    mean = s * inv_cnt
    # biased variance via E[x^2] - mean^2; clamp avoids rsqrt(neg) from cancellation
    var = jnp.maximum(sq * inv_cnt - mean * mean, 0.0)
    inv = jax.lax.rsqrt(var + EPS)

    # slice this tile's rows out of the resident affine params
    row0 = pl.multiple_of(pl.program_id(0) * ct, ct)
    w = w_ref[pl.ds(row0, ct), :]                  # (CT, 1)
    b = b_ref[pl.ds(row0, ct), :]                  # (CT, 1)
    scale = inv * w                                # (CT, 1)
    shift = b - mean * scale                       # (CT, 1)

    # single normalize + affine sweep
    o_ref[...] = x * scale[None, :, :] + shift[None, :, :]


def _pick_ch_tile(r, per_row_bytes, max_block_bytes=6 << 20):
    """Pick a channel tile: multiple of 8 dividing r (or r itself), block <= ~6 MB,
    preferring >=2 grid steps so v7x's two TensorCores both get work."""
    cands = [t for t in range(8, r + 1, 8) if r % t == 0]
    if not cands:
        return r  # block dim == full array dim is always a legal tile
    fit = [t for t in cands if t * per_row_bytes <= max_block_bytes] or [cands[0]]
    multi = [t for t in fit if r // t >= 2]
    return max(multi or fit)


def eight_bn_forward(x, conv_w, conv_b, *, ratio=2):
    """x: (N, C, H, W); conv_w: (C,1,1,1); conv_b: (C,)  (Affine = depthwise 1x1)."""
    N, C, H, W = x.shape
    assert N % ratio == 0, "batch must be divisible by the ghost ratio"
    G = ratio
    Nh = N // G
    R = G * C                      # virtual channels of the proxy BN
    HW = H * W

    x = x.astype(jnp.float32)
    # zero-copy ghost view: (N,C,H,W) -> (N//G, G*C, H*W); original sample n = k*G+g
    # maps to virtual sample k, virtual channel c' = g*C + c (matches torch.reshape).
    xr = x.reshape(Nh, R, HW)

    # per-virtual-channel affine params: row c' = g*C + c  ->  weight[c], bias[c]
    w_row = jnp.tile(conv_w.reshape(C).astype(jnp.float32), G).reshape(R, 1)
    b_row = jnp.tile(conv_b.reshape(C).astype(jnp.float32), G).reshape(R, 1)

    per_row_bytes = Nh * HW * 4
    ch_tile = _pick_ch_tile(R, per_row_bytes)
    block_bytes = ch_tile * per_row_bytes
    # 2x input + 2x output double-buffering plus slack; cap below v7x physical VMEM.
    vmem_limit = int(min(max(4 * block_bytes + (4 << 20), 32 << 20), 64 << 20))

    out = pl.pallas_call(
        ghostbn_affine_kernel,
        out_shape=jax.ShapeDtypeStruct((Nh, R, HW), jnp.float32),
        grid_spec=pltpu.PrefetchScalarGridSpec(
            num_scalar_prefetch=0,
            grid=(R // ch_tile,),
            in_specs=[
                pl.BlockSpec((Nh, ch_tile, HW), lambda i: (0, i, 0)),
                pl.BlockSpec((R, 1), lambda i: (0, 0)),   # resident affine weight
                pl.BlockSpec((R, 1), lambda i: (0, 0)),   # resident affine bias
            ],
            out_specs=pl.BlockSpec((Nh, ch_tile, HW), lambda i: (0, i, 0)),
        ),
        compiler_params=pltpu.CompilerParams(
            dimension_semantics=("parallel",),
            vmem_limit_bytes=vmem_limit,
        ),
    )(xr, w_row, b_row)

    # (Nh, G*C, HW) and (N, C, H, W) share the same flat layout -> free reshape back
    return out.reshape(N, C, H, W)


def reference_forward(x, conv_w, conv_b, *, ratio=2):
    N, C, H, W = x.shape
    Nh = N // ratio
    xp = x.reshape(Nh, ratio * C, H, W)
    mean = jnp.mean(xp, axis=(0, 2, 3), keepdims=True)
    var = jnp.mean((xp - mean) ** 2, axis=(0, 2, 3), keepdims=True)
    xn = ((xp - mean) / jnp.sqrt(var + EPS)).reshape(N, C, H, W)
    return xn * conv_w.reshape(1, C, 1, 1) + conv_b.reshape(1, C, 1, 1)


if __name__ == "__main__":
    key = jax.random.PRNGKey(0)
    k1, k2, k3 = jax.random.split(key, 3)

    N, C, H, W = 4, 8, 16, 16
    x = jax.random.normal(k1, (N, C, H, W), dtype=jnp.float32)

    # Affine module parameters: Conv2d(C, C, 1, groups=C, bias=True)
    conv_w = jax.random.normal(k2, (C, 1, 1, 1), dtype=jnp.float32) * 0.5 + 1.0
    conv_b = jax.random.normal(k3, (C,), dtype=jnp.float32) * 0.1

    y = eight_bn_forward(x, conv_w, conv_b)
    y = jax.block_until_ready(y)

    y_ref = reference_forward(x, conv_w, conv_b)
    assert y.shape == (N, C, H, W)
    assert jnp.allclose(y, y_ref, atol=1e-4, rtol=1e-4), "mismatch vs reference"

    print("KERNEL_OK")
</pallas_src>

<mosaic_0001>
module attributes {stable_mosaic.version = 11 : i64} {
  func.func @ghostbn_affine_kernel(%arg0: i32, %arg1: memref<2x8x256xf32, #tpu.memory_space<vmem>>, %arg2: memref<16x1xf32, #tpu.memory_space<vmem>>, %arg3: memref<16x1xf32, #tpu.memory_space<vmem>>, %arg4: memref<2x8x256xf32, #tpu.memory_space<vmem>>) attributes {dimension_semantics = [#tpu.dimension_semantics<parallel>], iteration_bounds = array<i64: 2>, scalar_prefetch = 0 : i64, scratch_operands = 0 : i64, tpu.core_type = #tpu.core_type<tc>, window_params = [{transform_indices = @transform_0, window_bounds = array<i64: 2, 8, 256>}, {pipeline_mode = #tpu.pipeline_mode<synchronous>, transform_indices = @transform_1, window_bounds = array<i64: 16, 1>}, {pipeline_mode = #tpu.pipeline_mode<synchronous>, transform_indices = @transform_2, window_bounds = array<i64: 16, 1>}, {transform_indices = @transform_3, window_bounds = array<i64: 2, 8, 256>}]} {
    %c0 = arith.constant 0 : index
    %c0_0 = arith.constant 0 : index
    %c0_1 = arith.constant 0 : index
    %0 = vector.load %arg1[%c0, %c0_0, %c0_1] : memref<2x8x256xf32, #tpu.memory_space<vmem>>, vector<2x8x256xf32>
    %cst = arith.constant dense<0.000000e+00> : vector<8x256xf32>
    %1 = vector.multi_reduction <add>, %0, %cst [0] : vector<2x8x256xf32> to vector<8x256xf32>
    %2 = arith.mulf %0, %0 : vector<2x8x256xf32>
    %cst_2 = arith.constant dense<0.000000e+00> : vector<8x256xf32>
    %3 = vector.multi_reduction <add>, %2, %cst_2 [0] : vector<2x8x256xf32> to vector<8x256xf32>
    %cst_3 = arith.constant dense<0.000000e+00> : vector<8xf32>
    %4 = vector.multi_reduction <add>, %1, %cst_3 [1] : vector<8x256xf32> to vector<8xf32>
    %5 = vector.shape_cast %4 : vector<8xf32> to vector<8x1xf32>
    %cst_4 = arith.constant dense<0.000000e+00> : vector<8xf32>
    %6 = vector.multi_reduction <add>, %3, %cst_4 [1] : vector<8x256xf32> to vector<8xf32>
    %7 = vector.shape_cast %6 : vector<8xf32> to vector<8x1xf32>
    %cst_5 = arith.constant 0.001953125 : f32
    %8 = vector.broadcast %cst_5 : f32 to vector<8x1xf32>
    %9 = arith.mulf %5, %8 : vector<8x1xf32>
    %cst_6 = arith.constant 0.001953125 : f32
    %10 = vector.broadcast %cst_6 : f32 to vector<8x1xf32>
    %11 = arith.mulf %7, %10 : vector<8x1xf32>
    %12 = arith.mulf %9, %9 : vector<8x1xf32>
    %13 = arith.subf %11, %12 : vector<8x1xf32>
    %cst_7 = arith.constant 0.000000e+00 : f32
    %14 = vector.broadcast %cst_7 : f32 to vector<8x1xf32>
    %15 = arith.maximumf %13, %14 : vector<8x1xf32>
    %cst_8 = arith.constant 9.99999974E-6 : f32
    %16 = vector.broadcast %cst_8 : f32 to vector<8x1xf32>
    %17 = arith.addf %15, %16 : vector<8x1xf32>
    %18 = math.rsqrt %17 : vector<8x1xf32>
    %c8_i32 = arith.constant 8 : i32
    %19 = arith.muli %arg0, %c8_i32 : i32
    %20 = tpu.assume_multiple %19, 8 : i32
    %21 = arith.index_cast %20 : i32 to index
    %c0_9 = arith.constant 0 : index
    %22 = vector.load %arg2[%21, %c0_9] : memref<16x1xf32, #tpu.memory_space<vmem>>, vector<8x1xf32>
    %23 = arith.index_cast %20 : i32 to index
    %c0_10 = arith.constant 0 : index
    %24 = vector.load %arg3[%23, %c0_10] : memref<16x1xf32, #tpu.memory_space<vmem>>, vector<8x1xf32>
    %25 = arith.mulf %18, %22 : vector<8x1xf32>
    %26 = arith.mulf %9, %25 : vector<8x1xf32>
    %27 = arith.subf %24, %26 : vector<8x1xf32>
    %28 = vector.shape_cast %25 : vector<8x1xf32> to vector<1x8x1xf32>
    %29 = vector.broadcast %28 : vector<1x8x1xf32> to vector<2x8x256xf32>
    %30 = arith.mulf %0, %29 : vector<2x8x256xf32>
    %31 = vector.shape_cast %27 : vector<8x1xf32> to vector<1x8x1xf32>
    %32 = vector.broadcast %31 : vector<1x8x1xf32> to vector<2x8x256xf32>
    %33 = arith.addf %30, %32 : vector<2x8x256xf32>
    %c0_11 = arith.constant 0 : index
    %c0_12 = arith.constant 0 : index
    %c0_13 = arith.constant 0 : index
    %34 = vector.load %arg4[%c0_11, %c0_12, %c0_13] : memref<2x8x256xf32, #tpu.memory_space<vmem>>, vector<2x8x256xf32>
    tpu.vector_store %arg4[%c0_11, %c0_12, %c0_13], %33 {strides = array<i32>} : memref<2x8x256xf32, #tpu.memory_space<vmem>>, vector<2x8x256xf32>,
    return
  }
  func.func @transform_0(%arg0: i32) -> (i32, i32, i32) {
    %c0_i32 = arith.constant 0 : i32
    %c0_i32_0 = arith.constant 0 : i32
    %c0_i32_1 = arith.constant 0 : i32
    return %c0_i32, %arg0, %c0_i32_0 : i32, i32, i32
  }
  func.func @transform_1(%arg0: i32) -> (i32, i32) {
    %c0_i32 = arith.constant 0 : i32
    %c0_i32_0 = arith.constant 0 : i32
    %c0_i32_1 = arith.constant 0 : i32
    return %c0_i32, %c0_i32_0 : i32, i32
  }
  func.func @transform_2(%arg0: i32) -> (i32, i32) {
    %c0_i32 = arith.constant 0 : i32
    %c0_i32_0 = arith.constant 0 : i32
    %c0_i32_1 = arith.constant 0 : i32
    return %c0_i32, %c0_i32_0 : i32, i32
  }
  func.func @transform_3(%arg0: i32) -> (i32, i32, i32) {
    %c0_i32 = arith.constant 0 : i32
    %c0_i32_0 = arith.constant 0 : i32
    %c0_i32_1 = arith.constant 0 : i32
    return %c0_i32, %arg0, %c0_i32_0 : i32, i32, i32
  }
}

</mosaic_0001>

<llo_original>
// kernel: tpu_custom_call.1
$region0: #{tpu_custom_call.1}
  #allocation0 [shape = 'u32[]', space=smem, size = 0x4, offset = 0x4, fixed_abs, tag = 'smem constant byte address 0x4 - core index']
  #allocation1 [shape = 'u32[144,128]{1,0:T(1,128)}', space=vmem, size = 0x12000, scoped, tag = 'internal scratch']
  %s0 = inlined_call_operand.hbm [shape: f32[2,16,256], index: 0, kind: input, shape index: {}]
  %s1 = inlined_call_operand.vmem [shape: f32[16,1], index: 1, kind: input, shape index: {}]
  %s2 = inlined_call_operand.vmem [shape: f32[16,1], index: 2, kind: input, shape index: {}]
  %s3 = inlined_call_operand.hbm [shape: f32[2,16,256], index: 3, kind: output, shape index: {}]
  %s4 = sld [smem:[#allocation0]]
  $region49: #{tpu_custom_call.1} parent=0
    _
  %s6 = ssub.s32 1, %s4
  %s7 = scalar_select 0, %s6, %s4
  $region1: #{tpu_custom_call.1} parent=0
    #allocation2 [shape = 'u8[32768]{0}', space=vmem, size = 0x8000, scoped, tag = 'input window, operand 0']
    #allocation3 [shape = 's32[2]{0}', space=sflag, size = 0x8, scoped, tag = 'scoped memory for tpu_custom_call.1']
    #allocation4 [shape = 's32[2]{0}', space=sflag, size = 0x8, scoped, tag = 'scoped memory for tpu_custom_call.1']
    #allocation5 [shape = 'u8[32768]{0}', space=vmem, size = 0x8000, scoped, tag = 'output window, operand 0']
    %8 = vsyncpa [#allocation3], 0
    %s9 = scalar_lea.sflag [#allocation3], 1
    %10 = vsyncpa %s9, 0
    %11 = vsyncpa [#allocation4], 0
    %s12 = scalar_lea.sflag [#allocation4], 1
    %13 = vsyncpa %s12, 0
    loop: start=0, step=1, limit=4
    $region2: #{tpu_custom_call.1} parent=1 // loop_pre_header
      _
    $region3: #{tpu_custom_call.1} parent=1 // loop_header
      %s15 = sphi 0, %s19
      %p16 = scmp.ge.s32.totalorder %s15, 4
      %s25 = sphi 0, %s27
      %s28 = sphi 0, %s25
      %s29 = sphi 0, %s28
      %s45 = sphi 0, %s29
      %s49 = sphi 0, %s49
      %s51 = sphi 0, %s49
      %s52 = sphi 0, %s51
      %s66 = sphi 0, %s52
      %s70 = sphi 0, %s70
      %s72 = sphi 0, %s70
      %s73 = sphi 0, %s72
      %s87 = sphi 0, %s73
      %s93 = sphi 0, %s95
      %s96 = sphi 0, %s93
      %s97 = sphi 0, %s96
      %s113 = sphi 0, %s97
    $region4: #{tpu_custom_call.1} parent=1 // loop_header_branch
      %18 = sbr.rel (%p16) target = $region8
    $region5: #{tpu_custom_call.1} parent=1 // loop_body
      %s20 = ssub.s32 %s15, 1
      %s21 = ssub.s32 %s15, 2
      %s22 = sadd.s32 %s15, 1
      %s23 = ssub.s32 %s15, %s22
      %p24 = scmp.eq.s32.totalorder %s23, 0
      %s26 = sadd.s32 %s25, 1
      %s27 = scalar_select %p24, %s25, %s26
      %p30 = pneg %p24
      %p31 = scmp.eq.s32.totalorder %s15, 1
      %p32 = por %p30, %p31
      %p33 = scmp.ne.s32.totalorder %s25, %s28
      %p34 = scmp.eq.s32.totalorder %s15, 0
      %p35 = por %p33, %p34
      %p36 = scmp.ne.s32.totalorder %s25, %s28
      %p37 = scmp.eq.s32.totalorder %s20, 1
      %p38 = por %p36, %p37
      %p39 = scmp.ne.s32.totalorder %s28, %s29
      %p40 = scmp.eq.s32.totalorder %s20, 0
      %p41 = por %p39, %p40
      %p42 = scmp.ne.s32.totalorder %s28, %s29
      %p43 = scmp.eq.s32.totalorder %s21, 1
      %p44 = por %p42, %p43
      %p46 = scmp.ne.s32.totalorder %s29, %s45
      %p47 = scmp.eq.s32.totalorder %s21, 0
      %p48 = por %p46, %p47
      %s50 = sadd.s32 %s49, 1
      %p53 = scmp.eq.s32.totalorder %s15, 1
      %p54 = scmp.ne.s32.totalorder %s49, %s51
      %p55 = scmp.eq.s32.totalorder %s15, 0
      %p56 = por %p54, %p55
      %p57 = scmp.ne.s32.totalorder %s49, %s51
      %p58 = scmp.eq.s32.totalorder %s20, 1
      %p59 = por %p57, %p58
      %p60 = scmp.ne.s32.totalorder %s51, %s52
      %p61 = scmp.eq.s32.totalorder %s20, 0
      %p62 = por %p60, %p61
      %p63 = scmp.ne.s32.totalorder %s51, %s52
      %p64 = scmp.eq.s32.totalorder %s21, 1
      %p65 = por %p63, %p64
      %p67 = scmp.ne.s32.totalorder %s52, %s66
      %p68 = scmp.eq.s32.totalorder %s21, 0
      %p69 = por %p67, %p68
      %s71 = sadd.s32 %s70, 1
      %p74 = scmp.eq.s32.totalorder %s15, 1
      %p75 = scmp.ne.s32.totalorder %s70, %s72
      %p76 = scmp.eq.s32.totalorder %s15, 0
      %p77 = por %p75, %p76
      %p78 = scmp.ne.s32.totalorder %s70, %s72
      %p79 = scmp.eq.s32.totalorder %s20, 1
      %p80 = por %p78, %p79
      %p81 = scmp.ne.s32.totalorder %s72, %s73
      %p82 = scmp.eq.s32.totalorder %s20, 0
      %p83 = por %p81, %p82
      %p84 = scmp.ne.s32.totalorder %s72, %s73
      %p85 = scmp.eq.s32.totalorder %s21, 1
      %p86 = por %p84, %p85
      %p88 = scmp.ne.s32.totalorder %s73, %s87
      %p89 = scmp.eq.s32.totalorder %s21, 0
      %p90 = por %p88, %p89
      %s91 = ssub.s32 %s15, %s22
      %p92 = scmp.eq.s32.totalorder %s91, 0
      %s94 = sadd.s32 %s93, 1
      %s95 = scalar_select %p92, %s93, %s94
      %p98 = pneg %p92
      %p99 = scmp.eq.s32.totalorder %s15, 1
      %p100 = por %p98, %p99
      %p101 = scmp.ne.s32.totalorder %s93, %s96
      %p102 = scmp.eq.s32.totalorder %s15, 0
      %p103 = por %p101, %p102
      %p104 = scmp.ne.s32.totalorder %s93, %s96
      %p105 = scmp.eq.s32.totalorder %s20, 1
      %p106 = por %p104, %p105
      %p107 = scmp.ne.s32.totalorder %s96, %s97
      %p108 = scmp.eq.s32.totalorder %s20, 0
      %p109 = por %p107, %p108
      %p110 = scmp.ne.s32.totalorder %s96, %s97
      %p111 = scmp.eq.s32.totalorder %s21, 1
      %p112 = por %p110, %p111
      %p114 = scmp.ne.s32.totalorder %s97, %s113
      %p115 = scmp.eq.s32.totalorder %s21, 0
      %p116 = por %p114, %p115
      %p117 = scmp.le.s32.totalorder 1, %s15
      %p118 = scmp.lt.s32.totalorder %s15, 3
      %p119 = pnand %p117, %p118
      %p120 = pneg %p119
      // Predicated region
      $region9: #{tpu_custom_call.1} parent=5 // pred_check
        _
      $region10: #{tpu_custom_call.1} parent=5 // pred_check_branch
        %122 = sbr.rel (%p119) target = $region12
      $region11: #{tpu_custom_call.1} parent=5 // pred_region
        %s123 = ssub.s32 %s15, 1
        // Predicated region
        $region13: #{tpu_custom_call.1} parent=11 // pred_check
          %p124 = pneg %p62
        $region14: #{tpu_custom_call.1} parent=11 // pred_check_branch
          %126 = sbr.rel (%p124) target = $region16
        $region15: #{tpu_custom_call.1} parent=11 // pred_region
          _
        $region16: #{tpu_custom_call.1} parent=11 // pred_fallthru
          _
        // Predicated region
        $region17: #{tpu_custom_call.1} parent=11 // pred_check
          %p127 = pneg %p83
        $region18: #{tpu_custom_call.1} parent=11 // pred_check_branch
          %129 = sbr.rel (%p127) target = $region20
        $region19: #{tpu_custom_call.1} parent=11 // pred_region
          _
        $region20: #{tpu_custom_call.1} parent=11 // pred_fallthru
          _
      $region12: #{tpu_custom_call.1} parent=5 // pred_fallthru
        _
      %p130 = scmp.lt.s32.totalorder %s15, 2
      // Predicated region
      $region21: #{tpu_custom_call.1} parent=5 // pred_check
        %p131 = pneg %p130
      $region22: #{tpu_custom_call.1} parent=5 // pred_check_branch
        %133 = sbr.rel (%p131) target = $region24
      $region23: #{tpu_custom_call.1} parent=5 // pred_region
        // Predicated region
        $region25: #{tpu_custom_call.1} parent=23 // pred_check
          %p134 = pneg %p35
        $region26: #{tpu_custom_call.1} parent=23 // pred_check_branch
          %136 = sbr.rel (%p134) target = $region28
        $region27: #{tpu_custom_call.1} parent=23 // pred_region
          %s137 = sand.u32 %s25, 1
          %s138 = scalar_lea.sflag [#allocation3], %s137
          %s139 = sand.u32 %s25, 1
          %s140 = smul.addr %s139, 32
          %s141 = scalar_lea.vmem [#allocation2], %s140
          %s143 = ssub.s32 512, 512
          %144 = vsyncadd %s138, %s143
          %s145 = smul.addr %s15, 2
          %s146 = smul.addr %s145, 128
          %s147 = scalar_lea.hbm %s0, %s146
          %s148 = sshll.u32 %s141, 4
          %s149 = int_to_ptr.vmem [resolvable:$true] %s148
          %154 = dma.hbm_to_vmem [thread:$0]  %s147, 512, %s149, %s138, 512, 256, 16
        $region28: #{tpu_custom_call.1} parent=23 // pred_fallthru
          _
      $region24: #{tpu_custom_call.1} parent=5 // pred_fallthru
        _
      %p155 = scmp.le.s32.totalorder 1, %s15
      %p156 = scmp.lt.s32.totalorder %s15, 3
      %p157 = pnand %p155, %p156
      %p158 = pneg %p157
      // Predicated region
      $region29: #{tpu_custom_call.1} parent=5 // pred_check
        _
      $region30: #{tpu_custom_call.1} parent=5 // pred_check_branch
        %160 = sbr.rel (%p157) target = $region32
      $region31: #{tpu_custom_call.1} parent=5 // pred_region
        %s161 = ssub.s32 %s15, 1
        %s162 = sand.u32 %s28, 1
        %s163 = scalar_lea.sflag [#allocation3], %s162
        %s164 = sand.u32 %s28, 1
        %s165 = smul.addr %s164, 32
        %s166 = scalar_lea.vmem [#allocation2], %s165
        // Predicated region
        $region33: #{tpu_custom_call.1} parent=31 // pred_check
          %p167 = pneg %p41
        $region34: #{tpu_custom_call.1} parent=31 // pred_check_branch
          %169 = sbr.rel (%p167) target = $region36
        $region35: #{tpu_custom_call.1} parent=31 // pred_region
          %170 = dma.done %s163, 512
        $region36: #{tpu_custom_call.1} parent=31 // pred_fallthru
          _
        %s171 = sand.u32 %s28, 1
        %s172 = scalar_lea.sflag [#allocation3], %s171
        %s173 = sand.u32 %s28, 1
        %s174 = smul.addr %s173, 32
        %s175 = scalar_lea.vmem [#allocation2], %s174
        %p176 = pneg %p41
        %p177 = pneg %p38
        %p178 = pneg %p62
        %p179 = pneg %p59
        %p180 = pneg %p83
        %p181 = pneg %p80
        %p182 = pneg %p109
        %p183 = pneg %p106
        %s184 = sand.u32 %s96, 1
        %s185 = scalar_lea.sflag [#allocation4], %s184
        %s186 = sand.u32 %s96, 1
        %s187 = smul.addr %s186, 32
        %s188 = scalar_lea.vmem [#allocation5], %s187
        %v189 = vld [vmem:[%s166] sm:$0xff]
        %v190 = vld [vmem:[%s166 + $0x8] sm:$0xff]
        %v191 = vld [vmem:[%s166 + $0x10] sm:$0xff]
        %v192 = vld [vmem:[%s166 + $0x18] sm:$0xff]
        %v193 = vadd.f32 %v189, %v191
        %v194 = vadd.f32 %v190, %v192
        %v195 = vmul.f32 %v189, %v189
        %v196 = vmul.f32 %v190, %v190
        %v197 = vmul.f32 %v191, %v191
        %v198 = vmul.f32 %v192, %v192
        %v199 = vadd.f32 %v195, %v197
        %v200 = vadd.f32 %v196, %v198
        %v201 = vadd.f32 %v193, %v194
        %202 = vadd.xlane.f32.xlu0 %v201
        %v203 = vpop.xlane.xlu0 %202
        %v204 = vadd.f32 %v199, %v200
        %205 = vadd.xlane.f32.xlu0 %v204
        %v206 = vpop.xlane.xlu0 %205
        %v207 = vmul.f32 %v203, 0.001953125
        %v208 = vmul.f32 %v206, 0.001953125
        %v209 = vmul.f32 %v207, %v207
        %v210 = vsub.f32 %v208, %v209
        %v211 = vmax.f32 %v210, 0.0
        %v212 = vadd.f32 %v211, 1e-05
        %v213 = vrsqrt.pop %v212
        %s214 = smul.u32 %s20, 8
        %s215 = scalar_lea.vmem %s1, %s214
        %v216 = vld [vmem:[%s215] sm:$0xff]
        %s217 = scalar_lea.vmem %s2, %s214
        %v218 = vld [vmem:[%s217] sm:$0xff]
        %v219 = vmul.f32 %v213, %v216
        %v220 = vmul.f32 %v207, %v219
        %v221 = vsub.f32 %v218, %v220
        %223 = vset.pattern.permute.xlu0 0
        %224 = vperm.xlu0 %223, %v219
        %v225 = vpop.permute.xlu0 %224
        %v227 = vmul.f32 %v189, %v225
        %v228 = vmul.f32 %v190, %v225
        %v229 = vmul.f32 %v191, %v225
        %v230 = vmul.f32 %v192, %v225
        %232 = vset.pattern.permute.xlu0 0
        %233 = vperm.xlu0 %232, %v221
        %v234 = vpop.permute.xlu0 %233
        %v236 = vadd.f32 %v227, %v234
        %v237 = vadd.f32 %v228, %v234
        %v238 = vadd.f32 %v229, %v234
        %v239 = vadd.f32 %v230, %v234
        %240 = vst [vmem:[%s188] sm:$0xff] %v236
        %241 = vst [vmem:[%s188 + $0x8] sm:$0xff] %v237
        %242 = vst [vmem:[%s188 + $0x10] sm:$0xff] %v238
        %243 = vst [vmem:[%s188 + $0x18] sm:$0xff] %v239
        %s244 = sand.u32 %s96, 1
        %s245 = scalar_lea.sflag [#allocation4], %s244
        %s246 = sand.u32 %s96, 1
        %s247 = smul.addr %s246, 32
        %s248 = scalar_lea.vmem [#allocation5], %s247
        // Predicated region
        $region37: #{tpu_custom_call.1} parent=31 // pred_check
          %p249 = pneg %p106
        $region38: #{tpu_custom_call.1} parent=31 // pred_check_branch
          %251 = sbr.rel (%p249) target = $region40
        $region39: #{tpu_custom_call.1} parent=31 // pred_region
          %s253 = ssub.s32 512, 512
          %254 = vsyncadd %s245, %s253
          %s255 = smul.addr %s20, 2
          %s256 = smul.addr %s255, 128
          %s257 = scalar_lea.hbm %s3, %s256
          %s258 = sshll.u32 %s248, 4
          %s259 = int_to_ptr.vmem [resolvable:$true] %s258
          %264 = dma.vmem_to_hbm [thread:$0]  %s259, 512, %s257, %s245, 256, 512, 16
        $region40: #{tpu_custom_call.1} parent=31 // pred_fallthru
          _
      $region32: #{tpu_custom_call.1} parent=5 // pred_fallthru
        _
      %p265 = scmp.le.s32.totalorder 2, %s15
      // Predicated region
      $region41: #{tpu_custom_call.1} parent=5 // pred_check
        %p266 = pneg %p265
      $region42: #{tpu_custom_call.1} parent=5 // pred_check_branch
        %268 = sbr.rel (%p266) target = $region44
      $region43: #{tpu_custom_call.1} parent=5 // pred_region
        %s269 = ssub.s32 %s15, 2
        // Predicated region
        $region45: #{tpu_custom_call.1} parent=43 // pred_check
          %p270 = pneg %p112
        $region46: #{tpu_custom_call.1} parent=43 // pred_check_branch
          %272 = sbr.rel (%p270) target = $region48
        $region47: #{tpu_custom_call.1} parent=43 // pred_region
          %s273 = sand.u32 %s97, 1
          %s274 = scalar_lea.sflag [#allocation4], %s273
          %s275 = sand.u32 %s97, 1
          %s276 = smul.addr %s275, 32
          %s277 = scalar_lea.vmem [#allocation5], %s276
          %278 = dma.done %s274, 512
        $region48: #{tpu_custom_call.1} parent=43 // pred_fallthru
          _
      $region44: #{tpu_custom_call.1} parent=5 // pred_fallthru
        _
    $region6: #{tpu_custom_call.1} parent=1 // loop_footer
      %s19 = sadd.s32 1, %s15
    $region7: #{tpu_custom_call.1} parent=1 // loop_footer_branch
      %14 = sbr.rel target = $region3
    $region8: #{tpu_custom_call.1} parent=1 // loop_exit
      _
    %279 = vsyncpa [#allocation3], 1
    %s280 = scalar_lea.sflag [#allocation3], 1
    %281 = vsyncpa %s280, 1
    %282 = vsyncpa [#allocation4], 1
    %s283 = scalar_lea.sflag [#allocation4], 1
    %284 = vsyncpa %s283, 1

</llo_original>
